<compile_context>
chip_gen: v7x
topology: tpu7x:2x2x1
jax: 0.10.0
libtpu: 0.0.40
codegen_flags: <defaults>
</compile_context>

<pallas_src>
import jax
import jax.numpy as jnp
from jax.experimental import pallas as pl
from jax.experimental.pallas import tpu as pltpu


def _relu_kernel(x_ref, o_ref):
    # Single VPU max against a splat zero (no full-tile zeros broadcast).
    o_ref[...] = jnp.maximum(x_ref[...], 0.0)


def _pick_block_cols(cols: int, rows: int, dtype_bytes: int):
    """Largest divisor of `cols` that is a multiple of 128, >= 512, and keeps
    one block <= ~2 MiB (so in+out double-buffered stays well inside v7x's
    scoped VMEM). Returns None if no such divisor exists."""
    max_cols = (2 * 1024 * 1024) // max(1, rows * dtype_bytes)
    best = None
    upper = min(cols, max_cols)
    c = 512
    while c <= upper:
        if cols % c == 0:
            best = c
        c += 128
    return best


def relu_pallas(x: jax.Array) -> jax.Array:
    """Elementwise ReLU; x is NCHW. Returns an array of the same shape/dtype."""
    orig_shape = x.shape
    total = x.size
    dtype_bytes = jnp.dtype(x.dtype).itemsize

    # Lane-dense slab: maximal sublane groups (largest divisor of total <= 8),
    # long last (lane) dim. Contiguity-preserving reshape -> free.
    rows = 1
    for r in range(8, 0, -1):
        if total % r == 0:
            rows = r
            break
    cols = total // rows
    x2d = x.reshape(rows, cols)

    # Advisory cost so XLA's scheduler can overlap this tiny custom call.
    cost = pl.CostEstimate(
        flops=total, transcendentals=0, bytes_accessed=2 * total * dtype_bytes
    )

    # Size-adaptive tiling: only bother once the tensor is several MiB; below
    # that, one 0.35 us grid step costs more than the entire DMA on any gen.
    SMALL_BYTES = 4 * 1024 * 1024
    block_cols = None
    if total * dtype_bytes >= SMALL_BYTES and rows == 8:
        block_cols = _pick_block_cols(cols, rows, dtype_bytes)

    if block_cols is None:
        # Single block: whole tensor resident in VMEM (~263 KiB here).
        # Block shape equals the full array dims -> exempt from the (8,128)
        # divisibility rule; cols is deliberately NOT padded to 128 lanes.
        out2d = pl.pallas_call(
            _relu_kernel,
            out_shape=jax.ShapeDtypeStruct((rows, cols), x.dtype),
            grid=(1,),
            in_specs=[pl.BlockSpec((rows, cols), lambda i: (0, 0))],
            out_specs=pl.BlockSpec((rows, cols), lambda i: (0, 0)),
            input_output_aliases={0: 0},
            cost_estimate=cost,
            compiler_params=pltpu.CompilerParams(
                dimension_semantics=("arbitrary",)
            ),
        )(x2d)
    else:
        # Large-activation path: >=512-lane blocks, pipelined + 'parallel' so
        # megacore / v7x dual-TC sharding can split the lane dimension.
        grid = (cols // block_cols,)
        out2d = pl.pallas_call(
            _relu_kernel,
            out_shape=jax.ShapeDtypeStruct((rows, cols), x.dtype),
            grid=grid,
            in_specs=[pl.BlockSpec((rows, block_cols), lambda i: (0, i))],
            out_specs=pl.BlockSpec((rows, block_cols), lambda i: (0, i)),
            input_output_aliases={0: 0},
            cost_estimate=cost,
            compiler_params=pltpu.CompilerParams(
                dimension_semantics=("parallel",)
            ),
        )(x2d)

    return out2d.reshape(orig_shape)


if __name__ == "__main__":
    key = jax.random.PRNGKey(0)
    # Same shape as the reference module's input: [1, 336, 14, 14]
    x283 = jax.random.normal(key, (1, 336, 14, 14), dtype=jnp.float32)

    # Reference computed first (safe even if the caller later donates x283).
    ref = jnp.maximum(x283, 0.0)

    x284 = relu_pallas(x283)
    jax.block_until_ready(x284)

    assert x284.shape == x283.shape
    assert x284.dtype == x283.dtype
    assert bool(jnp.allclose(x284, ref)), "ReLU mismatch vs reference"

    print("KERNEL_OK")
</pallas_src>

<mosaic_0001>
module attributes {stable_mosaic.version = 11 : i64} {
  func.func @_relu_kernel(%arg0: i32, %arg1: memref<8x8232xf32, #tpu.memory_space<vmem>>, %arg2: memref<8x8232xf32, #tpu.memory_space<vmem>>) attributes {dimension_semantics = [#tpu.dimension_semantics<arbitrary>], iteration_bounds = array<i64: 1>, scalar_prefetch = 0 : i64, scratch_operands = 0 : i64, tpu.core_type = #tpu.core_type<tc>, window_params = [{pipeline_mode = #tpu.pipeline_mode<synchronous>, transform_indices = @transform_0, window_bounds = array<i64: 8, 8232>}, {pipeline_mode = #tpu.pipeline_mode<synchronous>, transform_indices = @transform_1, window_bounds = array<i64: 8, 8232>}]} {
    %c0 = arith.constant 0 : index
    %c0_0 = arith.constant 0 : index
    %0 = vector.load %arg1[%c0, %c0_0] : memref<8x8232xf32, #tpu.memory_space<vmem>>, vector<8x8232xf32>
    %cst = arith.constant 0.000000e+00 : f32
    %1 = vector.broadcast %cst : f32 to vector<8x8232xf32>
    %2 = arith.maximumf %0, %1 : vector<8x8232xf32>
    %c0_1 = arith.constant 0 : index
    %c0_2 = arith.constant 0 : index
    %3 = vector.load %arg2[%c0_1, %c0_2] : memref<8x8232xf32, #tpu.memory_space<vmem>>, vector<8x8232xf32>
    tpu.vector_store %arg2[%c0_1, %c0_2], %2 {strides = array<i32>} : memref<8x8232xf32, #tpu.memory_space<vmem>>, vector<8x8232xf32>,
    return
  }
  func.func @transform_0(%arg0: i32) -> (i32, i32) {
    %c0_i32 = arith.constant 0 : i32
    %c0_i32_0 = arith.constant 0 : i32
    %c0_i32_1 = arith.constant 0 : i32
    return %c0_i32, %c0_i32_0 : i32, i32
  }
  func.func @transform_1(%arg0: i32) -> (i32, i32) {
    %c0_i32 = arith.constant 0 : i32
    %c0_i32_0 = arith.constant 0 : i32
    %c0_i32_1 = arith.constant 0 : i32
    return %c0_i32, %c0_i32_0 : i32, i32
  }
}

</mosaic_0001>

<llo_original>
// kernel: tpu_custom_call.1
$region0: #{tpu_custom_call.1}
  #allocation0 [shape = 'u32[]', space=smem, size = 0x4, offset = 0x4, fixed_abs, tag = 'smem constant byte address 0x4 - core index']
  #allocation1 [shape = 'u32[144,128]{1,0:T(1,128)}', space=vmem, size = 0x12000, scoped, tag = 'internal scratch']
  %s0 = inlined_call_operand.hbm [shape: f32[8,8232], index: 0, kind: input, shape index: {}, may-alias: {0,1}]
  %s1 = inlined_call_operand.hbm [shape: f32[8,8232], index: 1, kind: output, shape index: {}, may-alias: {0,1}]
  %s2 = sld [smem:[#allocation0]]
  $region18: #{tpu_custom_call.1} parent=0
    _
  %s4 = ssub.s32 1, %s2
  %s5 = scalar_select 0, %s4, %s2
  $region1: #{tpu_custom_call.1} parent=0
    #allocation2 [shape = 'u8[266240]{0}', space=vmem, size = 0x41000, scoped, tag = 'input window, operand 0, single buffered']
    #allocation3 [shape = 's32[1]{0}', space=sflag, size = 0x4, scoped, tag = 'scoped memory for tpu_custom_call.1']
    #allocation4 [shape = 's32[1]{0}', space=sflag, size = 0x4, scoped, tag = 'scoped memory for tpu_custom_call.1']
    #allocation5 [shape = 'u8[266240]{0}', space=vmem, size = 0x41000, scoped, tag = 'output window, operand 0, single buffered']
    %6 = vsyncpa [#allocation3], 0
    %7 = vsyncpa [#allocation4], 0
    // Predicated region
    $region2: #{tpu_custom_call.1} parent=1 // pred_check
      _
    $region3: #{tpu_custom_call.1} parent=1 // pred_check_branch
      %9 = sbr.rel (0) target = $region5
    $region4: #{tpu_custom_call.1} parent=1 // pred_region
      %s11 = ssub.s32 8320, 8320
      %12 = vsyncadd [#allocation3], %s11
      %s14 = sshll.u32 [#allocation2], 4
      %s15 = int_to_ptr.vmem [resolvable:$true] %s14
      %17 = dma.hbm_to_vmem [thread:$0]  %s0, 8320, %s15, [#allocation3]
    $region5: #{tpu_custom_call.1} parent=1 // pred_fallthru
      _
    // Predicated region
    $region6: #{tpu_custom_call.1} parent=1 // pred_check
      _
    $region7: #{tpu_custom_call.1} parent=1 // pred_check_branch
      %19 = sbr.rel (0) target = $region9
    $region8: #{tpu_custom_call.1} parent=1 // pred_region
      %20 = dma.done [#allocation3], 8320
    $region9: #{tpu_custom_call.1} parent=1 // pred_fallthru
      _
    %v21 = vld [vmem:[#allocation2] sm:$0xff]
    %v22 = vld [vmem:[#allocation2 + $0x8] sm:$0xff]
    %v23 = vld [vmem:[#allocation2 + $0x10] sm:$0xff]
    %v24 = vld [vmem:[#allocation2 + $0x18] sm:$0xff]
    %v25 = vld [vmem:[#allocation2 + $0x20] sm:$0xff]
    %v26 = vld [vmem:[#allocation2 + $0x28] sm:$0xff]
    %v27 = vld [vmem:[#allocation2 + $0x30] sm:$0xff]
    %v28 = vld [vmem:[#allocation2 + $0x38] sm:$0xff]
    %v29 = vld [vmem:[#allocation2 + $0x40] sm:$0xff]
    %v30 = vld [vmem:[#allocation2 + $0x48] sm:$0xff]
    %v31 = vld [vmem:[#allocation2 + $0x50] sm:$0xff]
    %v32 = vld [vmem:[#allocation2 + $0x58] sm:$0xff]
    %v33 = vld [vmem:[#allocation2 + $0x60] sm:$0xff]
    %v34 = vld [vmem:[#allocation2 + $0x68] sm:$0xff]
    %v35 = vld [vmem:[#allocation2 + $0x70] sm:$0xff]
    %v36 = vld [vmem:[#allocation2 + $0x78] sm:$0xff]
    %v37 = vld [vmem:[#allocation2 + $0x80] sm:$0xff]
    %v38 = vld [vmem:[#allocation2 + $0x88] sm:$0xff]
    %v39 = vld [vmem:[#allocation2 + $0x90] sm:$0xff]
    %v40 = vld [vmem:[#allocation2 + $0x98] sm:$0xff]
    %v41 = vld [vmem:[#allocation2 + $0xa0] sm:$0xff]
    %v42 = vld [vmem:[#allocation2 + $0xa8] sm:$0xff]
    %v43 = vld [vmem:[#allocation2 + $0xb0] sm:$0xff]
    %v44 = vld [vmem:[#allocation2 + $0xb8] sm:$0xff]
    %v45 = vld [vmem:[#allocation2 + $0xc0] sm:$0xff]
    %v46 = vld [vmem:[#allocation2 + $0xc8] sm:$0xff]
    %v47 = vld [vmem:[#allocation2 + $0xd0] sm:$0xff]
    %v48 = vld [vmem:[#allocation2 + $0xd8] sm:$0xff]
    %v49 = vld [vmem:[#allocation2 + $0xe0] sm:$0xff]
    %v50 = vld [vmem:[#allocation2 + $0xe8] sm:$0xff]
    %v51 = vld [vmem:[#allocation2 + $0xf0] sm:$0xff]
    %v52 = vld [vmem:[#allocation2 + $0xf8] sm:$0xff]
    %v53 = vld [vmem:[#allocation2 + $0x100] sm:$0xff]
    %v54 = vld [vmem:[#allocation2 + $0x108] sm:$0xff]
    %v55 = vld [vmem:[#allocation2 + $0x110] sm:$0xff]
    %v56 = vld [vmem:[#allocation2 + $0x118] sm:$0xff]
    %v57 = vld [vmem:[#allocation2 + $0x120] sm:$0xff]
    %v58 = vld [vmem:[#allocation2 + $0x128] sm:$0xff]
    %v59 = vld [vmem:[#allocation2 + $0x130] sm:$0xff]
    %v60 = vld [vmem:[#allocation2 + $0x138] sm:$0xff]
    %v61 = vld [vmem:[#allocation2 + $0x140] sm:$0xff]
    %v62 = vld [vmem:[#allocation2 + $0x148] sm:$0xff]
    %v63 = vld [vmem:[#allocation2 + $0x150] sm:$0xff]
    %v64 = vld [vmem:[#allocation2 + $0x158] sm:$0xff]
    %v65 = vld [vmem:[#allocation2 + $0x160] sm:$0xff]
    %v66 = vld [vmem:[#allocation2 + $0x168] sm:$0xff]
    %v67 = vld [vmem:[#allocation2 + $0x170] sm:$0xff]
    %v68 = vld [vmem:[#allocation2 + $0x178] sm:$0xff]
    %v69 = vld [vmem:[#allocation2 + $0x180] sm:$0xff]
    %v70 = vld [vmem:[#allocation2 + $0x188] sm:$0xff]
    %v71 = vld [vmem:[#allocation2 + $0x190] sm:$0xff]
    %v72 = vld [vmem:[#allocation2 + $0x198] sm:$0xff]
    %v73 = vld [vmem:[#allocation2 + $0x1a0] sm:$0xff]
    %v74 = vld [vmem:[#allocation2 + $0x1a8] sm:$0xff]
    %v75 = vld [vmem:[#allocation2 + $0x1b0] sm:$0xff]
    %v76 = vld [vmem:[#allocation2 + $0x1b8] sm:$0xff]
    %v77 = vld [vmem:[#allocation2 + $0x1c0] sm:$0xff]
    %v78 = vld [vmem:[#allocation2 + $0x1c8] sm:$0xff]
    %v79 = vld [vmem:[#allocation2 + $0x1d0] sm:$0xff]
    %v80 = vld [vmem:[#allocation2 + $0x1d8] sm:$0xff]
    %v81 = vld [vmem:[#allocation2 + $0x1e0] sm:$0xff]
    %v82 = vld [vmem:[#allocation2 + $0x1e8] sm:$0xff]
    %v83 = vld [vmem:[#allocation2 + $0x1f0] sm:$0xff]
    %v84 = vld [vmem:[#allocation2 + $0x1f8] sm:$0xff]
    %v85 = vld [vmem:[#allocation2 + $0x200] sm:$0xff]
    %v86 = vmax.f32 %v21, 0.0
    %v87 = vmax.f32 %v22, 0.0
    %v88 = vmax.f32 %v23, 0.0
    %v89 = vmax.f32 %v24, 0.0
    %v90 = vmax.f32 %v25, 0.0
    %v91 = vmax.f32 %v26, 0.0
    %v92 = vmax.f32 %v27, 0.0
    %v93 = vmax.f32 %v28, 0.0
    %v94 = vmax.f32 %v29, 0.0
    %v95 = vmax.f32 %v30, 0.0
    %v96 = vmax.f32 %v31, 0.0
    %v97 = vmax.f32 %v32, 0.0
    %v98 = vmax.f32 %v33, 0.0
    %v99 = vmax.f32 %v34, 0.0
    %v100 = vmax.f32 %v35, 0.0
    %v101 = vmax.f32 %v36, 0.0
    %v102 = vmax.f32 %v37, 0.0
    %v103 = vmax.f32 %v38, 0.0
    %v104 = vmax.f32 %v39, 0.0
    %v105 = vmax.f32 %v40, 0.0
    %v106 = vmax.f32 %v41, 0.0
    %v107 = vmax.f32 %v42, 0.0
    %v108 = vmax.f32 %v43, 0.0
    %v109 = vmax.f32 %v44, 0.0
    %v110 = vmax.f32 %v45, 0.0
    %v111 = vmax.f32 %v46, 0.0
    %v112 = vmax.f32 %v47, 0.0
    %v113 = vmax.f32 %v48, 0.0
    %v114 = vmax.f32 %v49, 0.0
    %v115 = vmax.f32 %v50, 0.0
    %v116 = vmax.f32 %v51, 0.0
    %v117 = vmax.f32 %v52, 0.0
    %v118 = vmax.f32 %v53, 0.0
    %v119 = vmax.f32 %v54, 0.0
    %v120 = vmax.f32 %v55, 0.0
    %v121 = vmax.f32 %v56, 0.0
    %v122 = vmax.f32 %v57, 0.0
    %v123 = vmax.f32 %v58, 0.0
    %v124 = vmax.f32 %v59, 0.0
    %v125 = vmax.f32 %v60, 0.0
    %v126 = vmax.f32 %v61, 0.0
    %v127 = vmax.f32 %v62, 0.0
    %v128 = vmax.f32 %v63, 0.0
    %v129 = vmax.f32 %v64, 0.0
    %v130 = vmax.f32 %v65, 0.0
    %v131 = vmax.f32 %v66, 0.0
    %v132 = vmax.f32 %v67, 0.0
    %v133 = vmax.f32 %v68, 0.0
    %v134 = vmax.f32 %v69, 0.0
    %v135 = vmax.f32 %v70, 0.0
    %v136 = vmax.f32 %v71, 0.0
    %v137 = vmax.f32 %v72, 0.0
    %v138 = vmax.f32 %v73, 0.0
    %v139 = vmax.f32 %v74, 0.0
    %v140 = vmax.f32 %v75, 0.0
    %v141 = vmax.f32 %v76, 0.0
    %v142 = vmax.f32 %v77, 0.0
    %v143 = vmax.f32 %v78, 0.0
    %v144 = vmax.f32 %v79, 0.0
    %v145 = vmax.f32 %v80, 0.0
    %v146 = vmax.f32 %v81, 0.0
    %v147 = vmax.f32 %v82, 0.0
    %v148 = vmax.f32 %v83, 0.0
    %v149 = vmax.f32 %v84, 0.0
    %v150 = vmax.f32 %v85, 0.0
    %151 = vst [vmem:[#allocation5] sm:$0xff] %v86
    %152 = vst [vmem:[#allocation5 + $0x8] sm:$0xff] %v87
    %153 = vst [vmem:[#allocation5 + $0x10] sm:$0xff] %v88
    %154 = vst [vmem:[#allocation5 + $0x18] sm:$0xff] %v89
    %155 = vst [vmem:[#allocation5 + $0x20] sm:$0xff] %v90
    %156 = vst [vmem:[#allocation5 + $0x28] sm:$0xff] %v91
    %157 = vst [vmem:[#allocation5 + $0x30] sm:$0xff] %v92
    %158 = vst [vmem:[#allocation5 + $0x38] sm:$0xff] %v93
    %159 = vst [vmem:[#allocation5 + $0x40] sm:$0xff] %v94
    %160 = vst [vmem:[#allocation5 + $0x48] sm:$0xff] %v95
    %161 = vst [vmem:[#allocation5 + $0x50] sm:$0xff] %v96
    %162 = vst [vmem:[#allocation5 + $0x58] sm:$0xff] %v97
    %163 = vst [vmem:[#allocation5 + $0x60] sm:$0xff] %v98
    %164 = vst [vmem:[#allocation5 + $0x68] sm:$0xff] %v99
    %165 = vst [vmem:[#allocation5 + $0x70] sm:$0xff] %v100
    %166 = vst [vmem:[#allocation5 + $0x78] sm:$0xff] %v101
    %167 = vst [vmem:[#allocation5 + $0x80] sm:$0xff] %v102
    %168 = vst [vmem:[#allocation5 + $0x88] sm:$0xff] %v103
    %169 = vst [vmem:[#allocation5 + $0x90] sm:$0xff] %v104
    %170 = vst [vmem:[#allocation5 + $0x98] sm:$0xff] %v105
    %171 = vst [vmem:[#allocation5 + $0xa0] sm:$0xff] %v106
    %172 = vst [vmem:[#allocation5 + $0xa8] sm:$0xff] %v107
    %173 = vst [vmem:[#allocation5 + $0xb0] sm:$0xff] %v108
    %174 = vst [vmem:[#allocation5 + $0xb8] sm:$0xff] %v109
    %175 = vst [vmem:[#allocation5 + $0xc0] sm:$0xff] %v110
    %176 = vst [vmem:[#allocation5 + $0xc8] sm:$0xff] %v111
    %177 = vst [vmem:[#allocation5 + $0xd0] sm:$0xff] %v112
    %178 = vst [vmem:[#allocation5 + $0xd8] sm:$0xff] %v113
    %179 = vst [vmem:[#allocation5 + $0xe0] sm:$0xff] %v114
    %180 = vst [vmem:[#allocation5 + $0xe8] sm:$0xff] %v115
    %181 = vst [vmem:[#allocation5 + $0xf0] sm:$0xff] %v116
    %182 = vst [vmem:[#allocation5 + $0xf8] sm:$0xff] %v117
    %183 = vst [vmem:[#allocation5 + $0x100] sm:$0xff] %v118
    %184 = vst [vmem:[#allocation5 + $0x108] sm:$0xff] %v119
    %185 = vst [vmem:[#allocation5 + $0x110] sm:$0xff] %v120
    %186 = vst [vmem:[#allocation5 + $0x118] sm:$0xff] %v121
    %187 = vst [vmem:[#allocation5 + $0x120] sm:$0xff] %v122
    %188 = vst [vmem:[#allocation5 + $0x128] sm:$0xff] %v123
    %189 = vst [vmem:[#allocation5 + $0x130] sm:$0xff] %v124
    %190 = vst [vmem:[#allocation5 + $0x138] sm:$0xff] %v125
    %191 = vst [vmem:[#allocation5 + $0x140] sm:$0xff] %v126
    %192 = vst [vmem:[#allocation5 + $0x148] sm:$0xff] %v127
    %193 = vst [vmem:[#allocation5 + $0x150] sm:$0xff] %v128
    %194 = vst [vmem:[#allocation5 + $0x158] sm:$0xff] %v129
    %195 = vst [vmem:[#allocation5 + $0x160] sm:$0xff] %v130
    %196 = vst [vmem:[#allocation5 + $0x168] sm:$0xff] %v131
    %197 = vst [vmem:[#allocation5 + $0x170] sm:$0xff] %v132
    %198 = vst [vmem:[#allocation5 + $0x178] sm:$0xff] %v133
    %199 = vst [vmem:[#allocation5 + $0x180] sm:$0xff] %v134
    %200 = vst [vmem:[#allocation5 + $0x188] sm:$0xff] %v135
    %201 = vst [vmem:[#allocation5 + $0x190] sm:$0xff] %v136
    %202 = vst [vmem:[#allocation5 + $0x198] sm:$0xff] %v137
    %203 = vst [vmem:[#allocation5 + $0x1a0] sm:$0xff] %v138
    %204 = vst [vmem:[#allocation5 + $0x1a8] sm:$0xff] %v139
    %205 = vst [vmem:[#allocation5 + $0x1b0] sm:$0xff] %v140
    %206 = vst [vmem:[#allocation5 + $0x1b8] sm:$0xff] %v141
    %207 = vst [vmem:[#allocation5 + $0x1c0] sm:$0xff] %v142
    %208 = vst [vmem:[#allocation5 + $0x1c8] sm:$0xff] %v143
    %209 = vst [vmem:[#allocation5 + $0x1d0] sm:$0xff] %v144
    %210 = vst [vmem:[#allocation5 + $0x1d8] sm:$0xff] %v145
    %211 = vst [vmem:[#allocation5 + $0x1e0] sm:$0xff] %v146
    %212 = vst [vmem:[#allocation5 + $0x1e8] sm:$0xff] %v147
    %213 = vst [vmem:[#allocation5 + $0x1f0] sm:$0xff] %v148
    %214 = vst [vmem:[#allocation5 + $0x1f8] sm:$0xff] %v149
    %vm215 = vcmask 326656
    %216 = vst.msk [vmem:[#allocation5 + $0x200] sm:$0xff] %vm215, %v150
    // Predicated region
    $region10: #{tpu_custom_call.1} parent=1 // pred_check
      _
    $region11: #{tpu_custom_call.1} parent=1 // pred_check_branch
      %218 = sbr.rel (0) target = $region13
    $region12: #{tpu_custom_call.1} parent=1 // pred_region
      %s220 = ssub.s32 8320, 8320
      %221 = vsyncadd [#allocation4], %s220
      %s223 = sshll.u32 [#allocation5], 4
      %s224 = int_to_ptr.vmem [resolvable:$true] %s223
      %226 = dma.vmem_to_hbm [thread:$0]  %s224, 8320, %s1, [#allocation4]
    $region13: #{tpu_custom_call.1} parent=1 // pred_fallthru
      _
    // Predicated region
    $region14: #{tpu_custom_call.1} parent=1 // pred_check
      _
    $region15: #{tpu_custom_call.1} parent=1 // pred_check_branch
      %228 = sbr.rel (0) target = $region17
    $region16: #{tpu_custom_call.1} parent=1 // pred_region
      %229 = dma.done [#allocation4], 8320
    $region17: #{tpu_custom_call.1} parent=1 // pred_fallthru
      _
    %230 = vsyncpa [#allocation3], 1
    %231 = vsyncpa [#allocation4], 1

</llo_original>
